<compile_context>
chip_gen: v7x
topology: tpu7x:2x2x1
jax: 0.10.0
libtpu: 0.0.40
codegen_flags: <defaults>
</compile_context>

<pallas_src>
import functools

import jax
import jax.numpy as jnp
from jax.experimental import pallas as pl
from jax.experimental.pallas import tpu as pltpu


def _round_up(x: int, m: int) -> int:
    return (x + m - 1) // m * m


def _pad2d(a, rows, cols):
    pr, pc = rows - a.shape[0], cols - a.shape[1]
    if pr == 0 and pc == 0:
        return a
    return jnp.pad(a, ((0, pr), (0, pc)))


# ---------------------------------------------------------------------------
# Kernels. Grid = (row tiles, hidden tiles); hidden is the reduction ("arbitrary") axis.
#   x_ref : (TM, idim_p)      w1_ref: (idim_p, TH)   b1_ref: (1, TH)
#   w2_ref: (TH, idim_p)      b2_ref: (1, idim_p)    o_ref : (TM, idim_p)
# ---------------------------------------------------------------------------
def _ffn_kernel_out_acc(x_ref, w1_ref, b1_ref, w2_ref, b2_ref, o_ref):
    """f32 output: accumulate the hidden-axis reduction directly into o_ref (no scratch)."""
    k = pl.program_id(1)
    nk = pl.num_programs(1)

    h = jnp.dot(x_ref[...], w1_ref[...], preferred_element_type=jnp.float32)
    h = jnp.maximum(h + b1_ref[...].astype(jnp.float32), 0.0)
    # Dropout: identity (eval-mode nn.Dropout).
    contrib = jnp.dot(h.astype(w2_ref.dtype), w2_ref[...],
                      preferred_element_type=jnp.float32)

    @pl.when(k == 0)
    def _init():
        o_ref[...] = contrib

    @pl.when(k > 0)
    def _accum():
        o_ref[...] += contrib

    @pl.when(k == nk - 1)
    def _finalize():
        o_ref[...] += b2_ref[...].astype(jnp.float32)


def _ffn_kernel_scratch(x_ref, w1_ref, b1_ref, w2_ref, b2_ref, o_ref, acc_ref):
    """Low-precision output: f32 VMEM accumulator, cast once at the last hidden step."""
    k = pl.program_id(1)
    nk = pl.num_programs(1)

    @pl.when(k == 0)
    def _init():
        acc_ref[...] = jnp.zeros_like(acc_ref)

    h = jnp.dot(x_ref[...], w1_ref[...], preferred_element_type=jnp.float32)
    h = jnp.maximum(h + b1_ref[...].astype(jnp.float32), 0.0)
    # Dropout: identity (eval-mode nn.Dropout).
    acc_ref[...] += jnp.dot(h.astype(w2_ref.dtype), w2_ref[...],
                            preferred_element_type=jnp.float32)

    @pl.when(k == nk - 1)
    def _finalize():
        o_ref[...] = (acc_ref[...] + b2_ref[...].astype(jnp.float32)).astype(o_ref.dtype)


# ---------------------------------------------------------------------------
# Jitted pallas_call wrapper (all tiling decisions are static args).
# ---------------------------------------------------------------------------
@functools.partial(
    jax.jit,
    static_argnames=("block_rows", "block_hidden", "weights_resident",
                     "use_out_acc", "vmem_limit_bytes"))
def _ffn_pallas(xs, w1, b1, w2, b2, *, block_rows, block_hidden,
                weights_resident, use_out_acc, vmem_limit_bytes):
    B, T, idim = xs.shape
    hidden = w1.shape[1]
    rows = B * T

    idim_p = _round_up(idim, 128)
    rows_p = _round_up(rows, block_rows)
    hidden_p = _round_up(hidden, block_hidden)
    nk = hidden_p // block_hidden

    # Zero padding is mathematically exact for this FFN (padded hidden cols give
    # ReLU(0) = 0 -> zero contribution; padded idim cols are sliced off below).
    # NOTE: choose 128-multiple model dims (or pre-pad weights once at init) so these
    # pads are no-ops in the hot path; they only emit jnp.pad when actually needed.
    x2d = _pad2d(xs.reshape(rows, idim), rows_p, idim_p)
    w1p = _pad2d(w1, idim_p, hidden_p)
    b1p = _pad2d(b1.reshape(1, hidden), 1, hidden_p)
    w2p = _pad2d(w2, hidden_p, idim_p)
    b2p = _pad2d(b2.reshape(1, idim), 1, idim_p)

    grid = (rows_p // block_rows, nk)

    def _wspec(shape, imap):
        # Weights-resident path: constant block index over the whole grid -> fetched
        # once from HBM; single buffer is enough. Streaming path: default double-buffer.
        if weights_resident:
            return pl.BlockSpec(shape, imap, pipeline_mode=pl.Buffered(1))
        return pl.BlockSpec(shape, imap)

    in_specs = [
        # activations: new row tile per i, constant over k (fetched once per row tile)
        pl.BlockSpec((block_rows, idim_p), lambda i, k: (i, 0)),
        _wspec((idim_p, block_hidden), lambda i, k: (0, k)),
        _wspec((1, block_hidden), lambda i, k: (0, k)),
        _wspec((block_hidden, idim_p), lambda i, k: (k, 0)),
        # b2 never changes -> single buffer
        pl.BlockSpec((1, idim_p), lambda i, k: (0, 0), pipeline_mode=pl.Buffered(1)),
    ]
    out_spec = pl.BlockSpec((block_rows, idim_p), lambda i, k: (i, 0))

    kernel = _ffn_kernel_out_acc if use_out_acc else _ffn_kernel_scratch
    scratch = [] if use_out_acc else [pltpu.VMEM((block_rows, idim_p), jnp.float32)]

    out2d = pl.pallas_call(
        kernel,
        out_shape=jax.ShapeDtypeStruct((rows_p, idim_p), xs.dtype),
        grid=grid,
        in_specs=in_specs,
        out_specs=out_spec,
        scratch_shapes=scratch,
        compiler_params=pltpu.CompilerParams(
            # row tiles are independent (megacore-shardable on v7x); hidden is a reduction
            dimension_semantics=("parallel", "arbitrary"),
            vmem_limit_bytes=vmem_limit_bytes,
        ),
    )(x2d, w1p, b1p, w2p, b2p)

    return out2d[:rows, :idim].reshape(B, T, idim)


# ---------------------------------------------------------------------------
# Public wrapper: tile selection + VMEM budgeting from static shapes.
# ---------------------------------------------------------------------------
def positionwise_feed_forward(xs, w1, b1, w2, b2, *, dropout_rate=0.0,
                              block_rows=None, block_hidden=None,
                              vmem_limit_bytes=None):
    """Fused Linear -> ReLU -> Dropout(eval) -> Linear.

    xs: (B, T, idim); weights stored (in, out) for the x @ W convention:
      w1: (idim, hidden), b1: (hidden,), w2: (hidden, idim), b2: (idim,)
    """
    # TODO(synk): training-mode dropout mask (pltpu.prng_seed + prng_random_bits) not
    # implemented; reject instead of silently diverging from torch nn.Dropout(train=True).
    if dropout_rate != 0.0:
        raise NotImplementedError("Only eval-mode (identity) dropout is supported.")

    B, T, idim = xs.shape
    hidden = w1.shape[1]
    rows = B * T

    x_isz = jnp.dtype(xs.dtype).itemsize
    w_isz = jnp.dtype(w1.dtype).itemsize
    out_isz = x_isz
    f32 = 4

    idim_p = _round_up(idim, 128)
    hidden_p_full = _round_up(hidden, 128)

    # Physical VMEM of this generation (v5e/v6e: 128 MiB, v7x: 64 MiB per TensorCore).
    try:
        vmem_cap = int(pltpu.get_tpu_info().vmem_capacity_bytes)
    except Exception:
        vmem_cap = 64 * 1024 * 1024  # conservative fallback (v7x-sized)
    budget = int(0.75 * vmem_cap)

    # ---- row tile: sit above the compute/BW ridge (~310 flops/byte on v7x, ~650-720
    # on v6e, ~240 on v5e) but keep >=2 tiles when possible so the 'parallel' grid
    # axis can shard across v7x's two TensorCores. ----------------------------------
    if block_rows is None:
        block_rows = 768 if vmem_cap >= (100 << 20) else 512
        if block_rows < rows < 2 * block_rows:
            block_rows = _round_up((rows + 1) // 2, 8)  # split evenly -> both cores busy
    block_rows = _round_up(max(8, min(block_rows, _round_up(rows, 8))), 8)

    use_out_acc = (jnp.dtype(xs.dtype) == jnp.float32)

    def _resident_bytes(br):
        return ((idim_p * hidden_p_full + hidden_p_full * idim_p) * w_isz   # W1 + W2 (x1)
                + 8 * (hidden_p_full + idim_p) * w_isz                      # b1 + b2
                + 2 * br * idim_p * x_isz                                   # x   (x2)
                + 2 * br * idim_p * out_isz                                 # out (x2)
                + br * hidden_p_full * f32                                  # h intermediate
                + (0 if use_out_acc else br * idim_p * f32))                # acc scratch

    def _tiled_bytes(br, bh):
        return (2 * br * idim_p * x_isz
                + 2 * idim_p * bh * w_isz
                + 2 * bh * idim_p * w_isz
                + 2 * 8 * bh * w_isz + 8 * idim_p * w_isz
                + 2 * br * idim_p * out_isz
                + br * bh * f32
                + (0 if use_out_acc else br * idim_p * f32))

    # ---- hidden tile: weights-resident fast path when padded W1/W2 (+ buffers) fit
    # the VMEM budget; otherwise stream the hidden axis with double-buffered weights.
    if block_hidden is None:
        if _resident_bytes(block_rows) <= budget:
            block_hidden = hidden_p_full
        else:
            block_hidden = 512
    block_hidden = _round_up(max(128, min(block_hidden, hidden_p_full)), 128)
    hidden_p = _round_up(hidden, block_hidden)
    weights_resident = (hidden_p // block_hidden == 1)

    # Shrink tiles if the estimated footprint still exceeds the budget (keeps large
    # models compilable on v7x's 64 MiB VMEM without caller intervention).
    est = (_resident_bytes(block_rows) if weights_resident
           else _tiled_bytes(block_rows, block_hidden))
    while est > budget and not weights_resident and block_hidden > 128:
        block_hidden = max(128, _round_up(block_hidden // 2, 128))
        est = _tiled_bytes(block_rows, block_hidden)
    while est > budget and block_rows > 8:
        block_rows = max(8, _round_up(block_rows // 2, 8))
        est = (_resident_bytes(block_rows) if weights_resident
               else _tiled_bytes(block_rows, block_hidden))
    # TODO(synk): for very large idim (>=4096) on v7x, additionally tile the idim axis
    # (second-GEMM N / first-GEMM K) instead of only shrinking block_rows.

    if vmem_limit_bytes is None:
        vmem_limit_bytes = int(min(max(int(est * 1.25) + (2 << 20), 32 << 20),
                                   int(0.9 * vmem_cap)))

    return _ffn_pallas(xs, w1, b1, w2, b2,
                       block_rows=int(block_rows),
                       block_hidden=int(block_hidden),
                       weights_resident=bool(weights_resident),
                       use_out_acc=bool(use_out_acc),
                       vmem_limit_bytes=int(vmem_limit_bytes))


# ---------------------------------------------------------------------------
# Self-test
# ---------------------------------------------------------------------------
def _init_params(key, idim, hidden, dtype=jnp.float32):
    """Deterministic init mirroring nn.Linear shapes: w_1 (idim->hidden), w_2 (hidden->idim)."""
    k1, k2, k3, k4 = jax.random.split(key, 4)
    lim1 = 1.0 / jnp.sqrt(idim)
    lim2 = 1.0 / jnp.sqrt(hidden)
    w1 = jax.random.uniform(k1, (idim, hidden), dtype, -lim1, lim1)
    b1 = jax.random.uniform(k2, (hidden,), dtype, -lim1, lim1)
    w2 = jax.random.uniform(k3, (hidden, idim), dtype, -lim2, lim2)
    b2 = jax.random.uniform(k4, (idim,), dtype, -lim2, lim2)
    return w1, b1, w2, b2


def _ref(xs, w1, b1, w2, b2):
    xs, w1, b1, w2, b2 = (a.astype(jnp.float32) for a in (xs, w1, b1, w2, b2))
    return jnp.maximum(xs @ w1 + b1, 0.0) @ w2 + b2


if __name__ == "__main__":
    key = jax.random.PRNGKey(0)

    # Case 1: small sub-128 feature dims -> lane padding path, weights-resident, f32 out-acc.
    B, T, idim, hidden = 2, 8, 32, 64
    kx, kp = jax.random.split(key)
    xs = jax.random.normal(kx, (B, T, idim), jnp.float32)
    params = _init_params(kp, idim, hidden)
    out = jax.block_until_ready(positionwise_feed_forward(xs, *params))
    assert out.shape == (B, T, idim)
    assert jnp.allclose(out, _ref(xs, *params), atol=1e-4, rtol=1e-4), "case 1 mismatch"

    # Case 2: ragged shapes + forced small tiles -> multi-step (row, hidden) grid,
    # row padding (144 -> 192) and accumulation over 3 hidden chunks into o_ref.
    B2, T2, idim2, hidden2 = 2, 72, 96, 320
    kx2, kp2 = jax.random.split(kp)
    xs2 = jax.random.normal(kx2, (B2, T2, idim2), jnp.float32)
    params2 = _init_params(kp2, idim2, hidden2)
    out2 = jax.block_until_ready(
        positionwise_feed_forward(xs2, *params2, block_rows=64, block_hidden=128))
    assert out2.shape == (B2, T2, idim2)
    assert jnp.allclose(out2, _ref(xs2, *params2), atol=1e-4, rtol=1e-4), "case 2 mismatch"

    # Case 3: bf16 activations/weights -> MXU at bf16 rate, f32 scratch accumulator path.
    B3, T3, idim3, hidden3 = 2, 16, 128, 256
    kx3, kp3 = jax.random.split(kp2)
    xs3 = jax.random.normal(kx3, (B3, T3, idim3), jnp.bfloat16)
    params3 = _init_params(kp3, idim3, hidden3, dtype=jnp.bfloat16)
    out3 = jax.block_until_ready(positionwise_feed_forward(xs3, *params3))
    assert out3.shape == (B3, T3, idim3)
    assert jnp.allclose(out3.astype(jnp.float32), _ref(xs3, *params3),
                        atol=5e-2, rtol=5e-2), "case 3 mismatch"

    print("KERNEL_OK")
</pallas_src>

<mosaic_0001>
module attributes {stable_mosaic.version = 11 : i64} {
  func.func @_ffn_kernel_out_acc(%arg0: i32, %arg1: i32, %arg2: memref<16x128xf32, #tpu.memory_space<vmem>>, %arg3: memref<128x128xf32, #tpu.memory_space<vmem>>, %arg4: memref<1x128xf32, #tpu.memory_space<vmem>>, %arg5: memref<128x128xf32, #tpu.memory_space<vmem>>, %arg6: memref<1x128xf32, #tpu.memory_space<vmem>>, %arg7: memref<16x128xf32, #tpu.memory_space<vmem>>) attributes {dimension_semantics = [#tpu.dimension_semantics<parallel>, #tpu.dimension_semantics<arbitrary>], iteration_bounds = array<i64: 1, 1>, scalar_prefetch = 0 : i64, scratch_operands = 0 : i64, tpu.core_type = #tpu.core_type<tc>, window_params = [{transform_indices = @transform_0, window_bounds = array<i64: 16, 128>}, {pipeline_mode = #tpu.pipeline_mode<synchronous>, transform_indices = @transform_1, window_bounds = array<i64: 128, 128>}, {pipeline_mode = #tpu.pipeline_mode<synchronous>, transform_indices = @transform_2, window_bounds = array<i64: 1, 128>}, {pipeline_mode = #tpu.pipeline_mode<synchronous>, transform_indices = @transform_3, window_bounds = array<i64: 128, 128>}, {pipeline_mode = #tpu.pipeline_mode<synchronous>, transform_indices = @transform_4, window_bounds = array<i64: 1, 128>}, {transform_indices = @transform_5, window_bounds = array<i64: 16, 128>}]} {
    %c0 = arith.constant 0 : index
    %c0_0 = arith.constant 0 : index
    %0 = vector.load %arg2[%c0, %c0_0] : memref<16x128xf32, #tpu.memory_space<vmem>>, vector<16x128xf32>
    %c0_1 = arith.constant 0 : index
    %c0_2 = arith.constant 0 : index
    %1 = vector.load %arg3[%c0_1, %c0_2] : memref<128x128xf32, #tpu.memory_space<vmem>>, vector<128x128xf32>
    %cst = arith.constant dense<0.000000e+00> : vector<16x128xf32>
    %2 = tpu.matmul %0, %1, %cst {dimension_numbers = #tpu.dot_dimension_numbers<[1], [0], [0], [1], [0, 0, 1, 1], [], []>} : vector<16x128xf32>, vector<128x128xf32>, vector<16x128xf32> -> vector<16x128xf32>
    %c0_3 = arith.constant 0 : index
    %c0_4 = arith.constant 0 : index
    %3 = vector.load %arg4[%c0_3, %c0_4] : memref<1x128xf32, #tpu.memory_space<vmem>>, vector<1x128xf32>
    %4 = vector.broadcast %3 : vector<1x128xf32> to vector<16x128xf32>
    %5 = arith.addf %2, %4 : vector<16x128xf32>
    %cst_5 = arith.constant 0.000000e+00 : f32
    %6 = vector.broadcast %cst_5 : f32 to vector<16x128xf32>
    %7 = arith.maximumf %5, %6 : vector<16x128xf32>
    %c0_6 = arith.constant 0 : index
    %c0_7 = arith.constant 0 : index
    %8 = vector.load %arg5[%c0_6, %c0_7] : memref<128x128xf32, #tpu.memory_space<vmem>>, vector<128x128xf32>
    %cst_8 = arith.constant dense<0.000000e+00> : vector<16x128xf32>
    %9 = tpu.matmul %7, %8, %cst_8 {dimension_numbers = #tpu.dot_dimension_numbers<[1], [0], [0], [1], [0, 0, 1, 1], [], []>} : vector<16x128xf32>, vector<128x128xf32>, vector<16x128xf32> -> vector<16x128xf32>
    %c0_i32 = arith.constant 0 : i32
    %10 = arith.cmpi eq, %arg1, %c0_i32 : i32
    %11 = arith.extui %10 : i1 to i32
    %c0_i32_9 = arith.constant 0 : i32
    %12 = arith.cmpi ne, %11, %c0_i32_9 : i32
    scf.if %12 {
      %c0_14 = arith.constant 0 : index
      %c0_15 = arith.constant 0 : index
      %19 = vector.load %arg7[%c0_14, %c0_15] : memref<16x128xf32, #tpu.memory_space<vmem>>, vector<16x128xf32>
      tpu.vector_store %arg7[%c0_14, %c0_15], %9 {strides = array<i32>} : memref<16x128xf32, #tpu.memory_space<vmem>>, vector<16x128xf32>,
    } else {
    }
    %c0_i32_10 = arith.constant 0 : i32
    %13 = arith.cmpi sgt, %arg1, %c0_i32_10 : i32
    %14 = arith.extui %13 : i1 to i32
    %c0_i32_11 = arith.constant 0 : i32
    %15 = arith.cmpi ne, %14, %c0_i32_11 : i32
    scf.if %15 {
      %c0_14 = arith.constant 0 : index
      %c0_15 = arith.constant 0 : index
      %19 = vector.load %arg7[%c0_14, %c0_15] : memref<16x128xf32, #tpu.memory_space<vmem>>, vector<16x128xf32>
      %20 = arith.addf %19, %9 : vector<16x128xf32>
      %c0_16 = arith.constant 0 : index
      %c0_17 = arith.constant 0 : index
      %21 = vector.load %arg7[%c0_16, %c0_17] : memref<16x128xf32, #tpu.memory_space<vmem>>, vector<16x128xf32>
      tpu.vector_store %arg7[%c0_16, %c0_17], %20 {strides = array<i32>} : memref<16x128xf32, #tpu.memory_space<vmem>>, vector<16x128xf32>,
    } else {
    }
    %c0_i32_12 = arith.constant 0 : i32
    %16 = arith.cmpi eq, %arg1, %c0_i32_12 : i32
    %17 = arith.extui %16 : i1 to i32
    %c0_i32_13 = arith.constant 0 : i32
    %18 = arith.cmpi ne, %17, %c0_i32_13 : i32
    scf.if %18 {
      %c0_14 = arith.constant 0 : index
      %c0_15 = arith.constant 0 : index
      %19 = vector.load %arg7[%c0_14, %c0_15] : memref<16x128xf32, #tpu.memory_space<vmem>>, vector<16x128xf32>
      %c0_16 = arith.constant 0 : index
      %c0_17 = arith.constant 0 : index
      %20 = vector.load %arg6[%c0_16, %c0_17] : memref<1x128xf32, #tpu.memory_space<vmem>>, vector<1x128xf32>
      %21 = vector.broadcast %20 : vector<1x128xf32> to vector<16x128xf32>
      %22 = arith.addf %19, %21 : vector<16x128xf32>
      %c0_18 = arith.constant 0 : index
      %c0_19 = arith.constant 0 : index
      %23 = vector.load %arg7[%c0_18, %c0_19] : memref<16x128xf32, #tpu.memory_space<vmem>>, vector<16x128xf32>
      tpu.vector_store %arg7[%c0_18, %c0_19], %22 {strides = array<i32>} : memref<16x128xf32, #tpu.memory_space<vmem>>, vector<16x128xf32>,
    } else {
    }
    return
  }
  func.func @transform_0(%arg0: i32, %arg1: i32) -> (i32, i32) {
    %c0_i32 = arith.constant 0 : i32
    %c0_i32_0 = arith.constant 0 : i32
    return %arg0, %c0_i32 : i32, i32
  }
  func.func @transform_1(%arg0: i32, %arg1: i32) -> (i32, i32) {
    %c0_i32 = arith.constant 0 : i32
    %c0_i32_0 = arith.constant 0 : i32
    return %c0_i32, %arg1 : i32, i32
  }
  func.func @transform_2(%arg0: i32, %arg1: i32) -> (i32, i32) {
    %c0_i32 = arith.constant 0 : i32
    %c0_i32_0 = arith.constant 0 : i32
    return %c0_i32, %arg1 : i32, i32
  }
  func.func @transform_3(%arg0: i32, %arg1: i32) -> (i32, i32) {
    %c0_i32 = arith.constant 0 : i32
    %c0_i32_0 = arith.constant 0 : i32
    return %arg1, %c0_i32 : i32, i32
  }
  func.func @transform_4(%arg0: i32, %arg1: i32) -> (i32, i32) {
    %c0_i32 = arith.constant 0 : i32
    %c0_i32_0 = arith.constant 0 : i32
    %c0_i32_1 = arith.constant 0 : i32
    return %c0_i32, %c0_i32_0 : i32, i32
  }
  func.func @transform_5(%arg0: i32, %arg1: i32) -> (i32, i32) {
    %c0_i32 = arith.constant 0 : i32
    %c0_i32_0 = arith.constant 0 : i32
    return %arg0, %c0_i32 : i32, i32
  }
}

</mosaic_0001>

<llo_original>
// kernel: _ffn_pallas.1
$region0: #{_ffn_pallas.1}
  #allocation0 [shape = 'u32[]', space=smem, size = 0x4, offset = 0x4, fixed_abs, tag = 'smem constant byte address 0x4 - core index']
  #allocation1 [shape = 'u32[144,128]{1,0:T(1,128)}', space=vmem, size = 0x12000, scoped, tag = 'internal scratch']
  %s0 = inlined_call_operand.vmem [shape: f32[16,128], index: 0, kind: input, shape index: {}]
  %s1 = inlined_call_operand.vmem [shape: f32[128,128], index: 1, kind: input, shape index: {}]
  %s2 = inlined_call_operand.vmem [shape: f32[1,128], index: 2, kind: input, shape index: {}]
  %s3 = inlined_call_operand.vmem [shape: f32[128,128], index: 3, kind: input, shape index: {}]
  %s4 = inlined_call_operand.vmem [shape: f32[1,128], index: 4, kind: input, shape index: {}]
  %s5 = inlined_call_operand.vmem [shape: f32[16,128], index: 5, kind: output, shape index: {}]
  %s6 = sld [smem:[#allocation0]]
  $region42: #{_ffn_pallas.1} parent=0
    _
  %s8 = ssub.s32 1, %s6
  %s9 = scalar_select 0, %s8, %s6
  // Predicated region
  $region2: #{_ffn_pallas.1} parent=0 // pred_check
    _
  $region3: #{_ffn_pallas.1} parent=0 // pred_check_branch
    %11 = sbr.rel (0) target = $region5
  $region4: #{_ffn_pallas.1} parent=0 // pred_region
    _
  $region5: #{_ffn_pallas.1} parent=0 // pred_fallthru
    _
  // Predicated region
  $region6: #{_ffn_pallas.1} parent=0 // pred_check
    _
  $region7: #{_ffn_pallas.1} parent=0 // pred_check_branch
    %13 = sbr.rel (0) target = $region9
  $region8: #{_ffn_pallas.1} parent=0 // pred_region
    _
  $region9: #{_ffn_pallas.1} parent=0 // pred_fallthru
    _
  // Predicated region
  $region10: #{_ffn_pallas.1} parent=0 // pred_check
    _
  $region11: #{_ffn_pallas.1} parent=0 // pred_check_branch
    %15 = sbr.rel (0) target = $region13
  $region12: #{_ffn_pallas.1} parent=0 // pred_region
    _
  $region13: #{_ffn_pallas.1} parent=0 // pred_fallthru
    _
  // Predicated region
  $region14: #{_ffn_pallas.1} parent=0 // pred_check
    _
  $region15: #{_ffn_pallas.1} parent=0 // pred_check_branch
    %17 = sbr.rel (0) target = $region17
  $region16: #{_ffn_pallas.1} parent=0 // pred_region
    _
  $region17: #{_ffn_pallas.1} parent=0 // pred_fallthru
    _
  // Predicated region
  $region18: #{_ffn_pallas.1} parent=0 // pred_check
    _
  $region19: #{_ffn_pallas.1} parent=0 // pred_check_branch
    %19 = sbr.rel (0) target = $region21
  $region20: #{_ffn_pallas.1} parent=0 // pred_region
    _
  $region21: #{_ffn_pallas.1} parent=0 // pred_fallthru
    _
  %v20 = vld [vmem:[%s0] sm:$0xff]
  %v21 = vld [vmem:[%s0 + $0x8] sm:$0xff]
  %v22 = vld [vmem:[%s1] sm:$0xff]
  %v23 = vld [vmem:[%s1 + $0x8] sm:$0xff]
  %v24 = vld [vmem:[%s1 + $0x10] sm:$0xff]
  %v25 = vld [vmem:[%s1 + $0x18] sm:$0xff]
  %v26 = vld [vmem:[%s1 + $0x20] sm:$0xff]
  %v27 = vld [vmem:[%s1 + $0x28] sm:$0xff]
  %v28 = vld [vmem:[%s1 + $0x30] sm:$0xff]
  %v29 = vld [vmem:[%s1 + $0x38] sm:$0xff]
  %v30 = vld [vmem:[%s1 + $0x40] sm:$0xff]
  %v31 = vld [vmem:[%s1 + $0x48] sm:$0xff]
  %v32 = vld [vmem:[%s1 + $0x50] sm:$0xff]
  %v33 = vld [vmem:[%s1 + $0x58] sm:$0xff]
  %v34 = vld [vmem:[%s1 + $0x60] sm:$0xff]
  %v35 = vld [vmem:[%s1 + $0x68] sm:$0xff]
  %v36 = vld [vmem:[%s1 + $0x70] sm:$0xff]
  %v37 = vld [vmem:[%s1 + $0x78] sm:$0xff]
  %v38 = vld [vmem:[%s2] sm:$0x1]
  %v40 = vlaneseq
  %v41 = vshrl.u32 %v40, 7
  %v42 = vsub.s32 0, %v41
  %v43 = vrot.slane %v38, %v42
  %45 = vmatprep.subr.mxu0 0.0
  %46 = vmatpush1.msra.mxu0 %v22
  %47 = vmatprep.subr.mxu0 0.0
  %48 = vmatpush1.msra.mxu0 %v23
  %49 = vmatprep.subr.mxu0 0.0
  %50 = vmatpush1.msra.mxu0 %v24
  %51 = vmatprep.subr.mxu0 0.0
  %52 = vmatpush1.msra.mxu0 %v25
  %53 = vmatprep.subr.mxu0 0.0
  %54 = vmatpush1.msra.mxu0 %v26
  %55 = vmatprep.subr.mxu0 0.0
  %56 = vmatpush1.msra.mxu0 %v27
  %57 = vmatprep.subr.mxu0 0.0
  %58 = vmatpush1.msra.mxu0 %v28
  %59 = vmatprep.subr.mxu0 0.0
  %60 = vmatpush1.msra.mxu0 %v29
  %61 = vmatprep.subr.mxu0 0.0
  %62 = vmatpush1.msra.mxu0 %v30
  %63 = vmatprep.subr.mxu0 0.0
  %64 = vmatpush1.msra.mxu0 %v31
  %65 = vmatprep.subr.mxu0 0.0
  %66 = vmatpush1.msra.mxu0 %v32
  %67 = vmatprep.subr.mxu0 0.0
  %68 = vmatpush1.msra.mxu0 %v33
  %69 = vmatprep.subr.mxu0 0.0
  %70 = vmatpush1.msra.mxu0 %v34
  %71 = vmatprep.subr.mxu0 0.0
  %72 = vmatpush1.msra.mxu0 %v35
  %73 = vmatprep.subr.mxu0 0.0
  %74 = vmatpush1.msra.mxu0 %v36
  %75 = vmatprep.subr.mxu0 0.0
  %76 = vmatpush1.msra.mxu0 %v37
  %77 = vmatprep.subr.mxu0 0.0
  %78 = vmatpush1.msra.mxu0 0.0
  %79 = vmatprep.subr.mxu0 0.0
  %80 = vmatpush1.msra.mxu0 0.0
  %81 = vmatprep.subr.mxu0 0.0
  %82 = vmatpush1.msra.mxu0 0.0
  %83 = vmatprep.subr.mxu0 0.0
  %84 = vmatpush1.msra.mxu0 0.0
  %85 = vmatprep.subr.mxu0 0.0
  %86 = vmatpush1.msra.mxu0 0.0
  %87 = vmatprep.subr.mxu0 0.0
  %88 = vmatpush1.msra.mxu0 0.0
  %89 = vmatprep.subr.mxu0 0.0
  %90 = vmatpush1.msra.mxu0 0.0
  %91 = vmatprep.subr.mxu0 0.0
  %92 = vmatpush1.msra.mxu0 0.0
  %93 = vmatprep.subr.mxu0 0.0
  %94 = vmatpush1.msra.mxu0 0.0
  %95 = vmatprep.subr.mxu0 0.0
  %96 = vmatpush1.msra.mxu0 0.0
  %97 = vmatprep.subr.mxu0 0.0
  %98 = vmatpush1.msra.mxu0 0.0
  %99 = vmatprep.subr.mxu0 0.0
  %100 = vmatpush1.msra.mxu0 0.0
  %101 = vmatprep.subr.mxu0 0.0
  %102 = vmatpush1.msra.mxu0 0.0
  %103 = vmatprep.subr.mxu0 0.0
  %104 = vmatpush1.msra.mxu0 0.0
  %105 = vmatprep.subr.mxu0 0.0
  %106 = vmatpush1.msra.mxu0 0.0
  %107 = vmatprep.subr.mxu0 0.0
  %108 = vmatpush1.msra.mxu0 0.0
  %109 = vmatprep.mubr.f32.mxu0 0.0
  %110 = vmatmul.mubr.f32.gmra.mrb[0].mxu0 %v20
  %v111 = vpop.f32.mrb[0].mxu0
  %v112 = vadd.f32 %v43, %v111
  %v113 = vpop.f32.mrb[0].mxu0
  %114 = vmatprep.mubr.f32.mxu0 0.0
  %115 = vmatmul.mubr.f32.gmra.mrb[0].mxu0 %v21
  %v116 = vpop.f32.mrb[0].mxu0
  %v117 = vadd.f32 %v43, %v116
  %v118 = vpop.f32.mrb[0].mxu0
  %119 = vdwg.mxu0
  %v120 = vmax.f32 %v112, 0.0
  %v121 = vmax.f32 %v117, 0.0
  %v122 = vld [vmem:[%s3] sm:$0xff]
  %v123 = vld [vmem:[%s3 + $0x8] sm:$0xff]
  %v124 = vld [vmem:[%s3 + $0x10] sm:$0xff]
  %v125 = vld [vmem:[%s3 + $0x18] sm:$0xff]
  %v126 = vld [vmem:[%s3 + $0x20] sm:$0xff]
  %v127 = vld [vmem:[%s3 + $0x28] sm:$0xff]
  %v128 = vld [vmem:[%s3 + $0x30] sm:$0xff]
  %v129 = vld [vmem:[%s3 + $0x38] sm:$0xff]
  %v130 = vld [vmem:[%s3 + $0x40] sm:$0xff]
  %v131 = vld [vmem:[%s3 + $0x48] sm:$0xff]
  %v132 = vld [vmem:[%s3 + $0x50] sm:$0xff]
  %v133 = vld [vmem:[%s3 + $0x58] sm:$0xff]
  %v134 = vld [vmem:[%s3 + $0x60] sm:$0xff]
  %v135 = vld [vmem:[%s3 + $0x68] sm:$0xff]
  %v136 = vld [vmem:[%s3 + $0x70] sm:$0xff]
  %v137 = vld [vmem:[%s3 + $0x78] sm:$0xff]
  %138 = vmatprep.subr.mxu0 0.0
  %139 = vmatpush1.msra.mxu0 %v122
  %140 = vmatprep.subr.mxu0 0.0
  %141 = vmatpush1.msra.mxu0 %v123
  %142 = vmatprep.subr.mxu0 0.0
  %143 = vmatpush1.msra.mxu0 %v124
  %144 = vmatprep.subr.mxu0 0.0
  %145 = vmatpush1.msra.mxu0 %v125
  %146 = vmatprep.subr.mxu0 0.0
  %147 = vmatpush1.msra.mxu0 %v126
  %148 = vmatprep.subr.mxu0 0.0
  %149 = vmatpush1.msra.mxu0 %v127
  %150 = vmatprep.subr.mxu0 0.0
  %151 = vmatpush1.msra.mxu0 %v128
  %152 = vmatprep.subr.mxu0 0.0
  %153 = vmatpush1.msra.mxu0 %v129
  %154 = vmatprep.subr.mxu0 0.0
  %155 = vmatpush1.msra.mxu0 %v130
  %156 = vmatprep.subr.mxu0 0.0
  %157 = vmatpush1.msra.mxu0 %v131
  %158 = vmatprep.subr.mxu0 0.0
  %159 = vmatpush1.msra.mxu0 %v132
  %160 = vmatprep.subr.mxu0 0.0
  %161 = vmatpush1.msra.mxu0 %v133
  %162 = vmatprep.subr.mxu0 0.0
  %163 = vmatpush1.msra.mxu0 %v134
  %164 = vmatprep.subr.mxu0 0.0
  %165 = vmatpush1.msra.mxu0 %v135
  %166 = vmatprep.subr.mxu0 0.0
  %167 = vmatpush1.msra.mxu0 %v136
  %168 = vmatprep.subr.mxu0 0.0
  %169 = vmatpush1.msra.mxu0 %v137
  %170 = vmatprep.subr.mxu0 0.0
  %171 = vmatpush1.msra.mxu0 0.0
  %172 = vmatprep.subr.mxu0 0.0
  %173 = vmatpush1.msra.mxu0 0.0
  %174 = vmatprep.subr.mxu0 0.0
  %175 = vmatpush1.msra.mxu0 0.0
  %176 = vmatprep.subr.mxu0 0.0
  %177 = vmatpush1.msra.mxu0 0.0
  %178 = vmatprep.subr.mxu0 0.0
  %179 = vmatpush1.msra.mxu0 0.0
  %180 = vmatprep.subr.mxu0 0.0
  %181 = vmatpush1.msra.mxu0 0.0
  %182 = vmatprep.subr.mxu0 0.0
  %183 = vmatpush1.msra.mxu0 0.0
  %184 = vmatprep.subr.mxu0 0.0
  %185 = vmatpush1.msra.mxu0 0.0
  %186 = vmatprep.subr.mxu0 0.0
  %187 = vmatpush1.msra.mxu0 0.0
  %188 = vmatprep.subr.mxu0 0.0
  %189 = vmatpush1.msra.mxu0 0.0
  %190 = vmatprep.subr.mxu0 0.0
  %191 = vmatpush1.msra.mxu0 0.0
  %192 = vmatprep.subr.mxu0 0.0
  %193 = vmatpush1.msra.mxu0 0.0
  %194 = vmatprep.subr.mxu0 0.0
  %195 = vmatpush1.msra.mxu0 0.0
  %196 = vmatprep.subr.mxu0 0.0
  %197 = vmatpush1.msra.mxu0 0.0
  %198 = vmatprep.subr.mxu0 0.0
  %199 = vmatpush1.msra.mxu0 0.0
  %200 = vmatprep.subr.mxu0 0.0
  %201 = vmatpush1.msra.mxu0 0.0
  %202 = vmatprep.mubr.f32.mxu0 0.0
  %203 = vmatmul.mubr.f32.gmra.mrb[0].mxu0 %v120
  %v204 = vpop.f32.mrb[0].mxu0
  %v205 = vadd.f32 0.0, %v204
  %v206 = vpop.f32.mrb[0].mxu0
  %207 = vmatprep.mubr.f32.mxu0 0.0
  %208 = vmatmul.mubr.f32.gmra.mrb[0].mxu0 %v121
  %v209 = vpop.f32.mrb[0].mxu0
  %v210 = vadd.f32 0.0, %v209
  %v211 = vpop.f32.mrb[0].mxu0
  %212 = vdwg.mxu0
  %p213 = scmp.eq.s32.totalorder 0, 0
  // Predicated region
  $region22: #{_ffn_pallas.1} parent=0 // pred_check
    %p214 = pneg %p213
  $region23: #{_ffn_pallas.1} parent=0 // pred_check_branch
    %216 = sbr.rel (%p214) target = $region25
  $region24: #{_ffn_pallas.1} parent=0 // pred_region
    %217 = vst [vmem:[%s5] sm:$0xff] %v205
    %218 = vst [vmem:[%s5 + $0x8] sm:$0xff] %v210
  $region25: #{_ffn_pallas.1} parent=0 // pred_fallthru
    _
  %p219 = scmp.gt.s32.totalorder 0, 0
  // Predicated region
  $region26: #{_ffn_pallas.1} parent=0 // pred_check
    %p220 = pneg %p219
  $region27: #{_ffn_pallas.1} parent=0 // pred_check_branch
    %222 = sbr.rel (%p220) target = $region29
  $region28: #{_ffn_pallas.1} parent=0 // pred_region
    %v223 = vld [vmem:[%s5] sm:$0xff]
    %v224 = vld [vmem:[%s5 + $0x8] sm:$0xff]
    %v225 = vadd.f32 %v223, %v205
    %v226 = vadd.f32 %v224, %v210
    %227 = vst [vmem:[%s5] sm:$0xff] %v225
    %228 = vst [vmem:[%s5 + $0x8] sm:$0xff] %v226
  $region29: #{_ffn_pallas.1} parent=0 // pred_fallthru
    _
  // Predicated region
  $region30: #{_ffn_pallas.1} parent=0 // pred_check
    %p229 = pneg %p213
  $region31: #{_ffn_pallas.1} parent=0 // pred_check_branch
    %231 = sbr.rel (%p229) target = $region33
  $region32: #{_ffn_pallas.1} parent=0 // pred_region
    %v232 = vld [vmem:[%s5] sm:$0xff]
    %v233 = vld [vmem:[%s5 + $0x8] sm:$0xff]
    %v234 = vld [vmem:[%s4] sm:$0x1]
    %v236 = vlaneseq
    %v237 = vshrl.u32 %v236, 7
    %v238 = vsub.s32 0, %v237
    %v239 = vrot.slane %v234, %v238
    %v241 = vadd.f32 %v232, %v239
    %v242 = vadd.f32 %v233, %v239
    %243 = vst [vmem:[%s5] sm:$0xff] %v241
    %244 = vst [vmem:[%s5 + $0x8] sm:$0xff] %v242
  $region33: #{_ffn_pallas.1} parent=0 // pred_fallthru
    _
  // Predicated region
  $region34: #{_ffn_pallas.1} parent=0 // pred_check
    _
  $region35: #{_ffn_pallas.1} parent=0 // pred_check_branch
    %246 = sbr.rel (0) target = $region37
  $region36: #{_ffn_pallas.1} parent=0 // pred_region
    _
  $region37: #{_ffn_pallas.1} parent=0 // pred_fallthru
    _
  // Predicated region
  $region38: #{_ffn_pallas.1} parent=0 // pred_check
    _
  $region39: #{_ffn_pallas.1} parent=0 // pred_check_branch
    %248 = sbr.rel (0) target = $region41
  $region40: #{_ffn_pallas.1} parent=0 // pred_region
    _
  $region41: #{_ffn_pallas.1} parent=0 // pred_fallthru
    _

</llo_original>
